<compile_context>
chip_gen: v7x
topology: tpu7x:2x2x1
jax: 0.10.0
libtpu: 0.0.40
codegen_flags: <defaults>
</compile_context>

<pallas_src>
import functools

import jax
import jax.numpy as jnp
from jax.experimental import pallas as pl
from jax.experimental.pallas import tpu as pltpu


def _cdiv(a, b):
    return (a + b - 1) // b


def _pick_tile(total_rows, n_classes, itemsize, req_rows=None):
    """Pick tile rows (multiple of 8) and an explicit scoped-VMEM limit."""
    try:
        cap = int(pltpu.get_tpu_info().vmem_capacity_bytes)
    except Exception:
        cap = 64 * 1024 * 1024                       # v7x-safe fallback
    # Working-set bytes per (8,128) row-group of pixels:
    #   double-buffered logits block + double-buffered target block
    #   + ~(6C + 6) live f32 temporaries (e, p, one-hot terms, logz, ...).
    per_group = (2 * n_classes * itemsize + 2 * 4 + (6 * n_classes + 6) * 4) * 8 * 128
    if req_rows is None:
        budget = min(cap, 128 * 1024 * 1024) // 4
        groups = max(1, budget // per_group)
    else:
        groups = max(1, int(req_rows) // 8)
    groups = min(groups, 128)                        # cap tile at 128*8*128 = 131072 px
    groups = min(groups, max(1, _cdiv(total_rows, 8)))
    out_bytes = 4 * (2 * n_classes + 1) * 8 * 128 * 4
    est = groups * per_group + out_bytes + (1 << 20)
    vmem_limit = int(min(cap * 4 // 5, max(32 * 1024 * 1024, 2 * est)))
    return groups * 8, vmem_limit


def _dice_ce_kernel(x_ref, t_ref, out_ref, *, n_classes):
    """One spatial tile of one (sample, split).

    x_ref:   (C, tg, 8, 128) logits
    t_ref:   (tg, 8, 128)    int32 labels (-1 = padded pixel)
    out_ref: (2C+1, 8, 128)  lane/sublane partials, resident across the tile axis:
             rows [0,C)  = sum p*y per class, rows [C,2C) = sum p + sum y per class,
             row 2C      = sum of -log p_target.
    """
    s_idx = pl.program_id(1)

    @pl.when(s_idx == 0)
    def _init():
        out_ref[...] = jnp.zeros_like(out_ref)

    x = x_ref[...].astype(jnp.float32)      # (C, tg, 8, 128)
    t = t_ref[...]                          # (tg, 8, 128)

    # Numerically stable softmax / log-sum-exp over the channel (page) axis:
    # full-vreg VPU reductions over C pages.
    m = jnp.max(x, axis=0)                  # (tg, 8, 128)
    e = jnp.exp(x - m[None])                # (C, tg, 8, 128)
    z = jnp.sum(e, axis=0)                  # (tg, 8, 128)
    if hasattr(pl, "reciprocal"):
        inv_z = pl.reciprocal(z, approx=False)   # EUP slot, exact
    else:
        inv_z = 1.0 / z
    p = e * inv_z[None]                     # softmax probs (C, tg, 8, 128)
    logz = jnp.log(z) + m                   # (tg, 8, 128)

    # Per-class partials reduced over the tile's row-group axis (pure vreg adds).
    # Padded pixels have label -1, so all one-hot terms vanish there; their
    # p = 1/C and ce = log(C) contributions are corrected in the epilogue.
    psum = jnp.sum(p, axis=1)               # (C, 8, 128)  sum of probs
    x_tgt = jnp.zeros_like(logz)            # logit at the target class
    inter_rows = []
    ycnt_rows = []
    for c in range(n_classes):              # C is small (2-5); static unroll
        is_c = t == c                       # (tg, 8, 128)
        x_tgt = x_tgt + jnp.where(is_c, x[c], 0.0)
        inter_rows.append(jnp.sum(jnp.where(is_c, p[c], 0.0), axis=0))   # (8,128)
        ycnt_rows.append(jnp.sum(is_c.astype(jnp.float32), axis=0))      # (8,128)
    inter_part = jnp.stack(inter_rows, axis=0)            # (C, 8, 128) sum p*y
    denom_part = psum + jnp.stack(ycnt_rows, axis=0)      # (C, 8, 128) sum p + sum y
    ce_part = jnp.sum(logz - x_tgt, axis=0)               # (8, 128)    sum -log p_t

    out_ref[:n_classes] += inter_part
    out_ref[n_classes:2 * n_classes] += denom_part
    out_ref[2 * n_classes] += ce_part


def dice_and_ce_loss(outputs, targets, dice_weight=None, ce_weight=None, *,
                     default_dice_weight=1.0, default_ce_weight=1.0,
                     smooth=1e-5, tile_s=None, n_spatial_splits=None):
    """outputs: (N, C, *spatial) float logits; targets: (N, *spatial) int labels."""
    # Mirror the PyTorch module's falsy-weight handling (weight=0 -> default).
    if not dice_weight:
        dice_weight = default_dice_weight
    if not ce_weight:
        ce_weight = default_ce_weight

    N, C = int(outputs.shape[0]), int(outputs.shape[1])
    S = 1
    for d in outputs.shape[2:]:
        S *= int(d)

    # v7x has 2 TensorCores; with only the batch axis "parallel", N==1 would
    # leave one idle, so split the spatial axis across the parallel grid axis.
    if n_spatial_splits is None:
        n_spatial_splits = 2 if N == 1 else 1
    K = max(1, int(n_spatial_splits))

    itemsize = jnp.dtype(outputs.dtype).itemsize
    total_rows = _cdiv(S, 128)
    req_rows = None
    if tile_s is not None:
        req_rows = max(8, (int(tile_s) // 128 // 8) * 8)
    tile_rows, vmem_limit = _pick_tile(total_rows, C, itemsize, req_rows)
    tg = tile_rows // 8                                   # (8,128) groups per tile

    n_tiles = _cdiv(_cdiv(total_rows, tile_rows), K)      # tiles per spatial split
    rows_pad = K * n_tiles * tile_rows
    S_pad = rows_pad * 128

    # Relayout: pixels -> (row_groups, 8, 128); channels kept adjacent per sample.
    x = outputs.reshape(N * C, S)
    t = targets.reshape(N, S).astype(jnp.int32)
    if S_pad != S:
        x = jnp.pad(x, ((0, 0), (0, S_pad - S)))                       # zero logits
        t = jnp.pad(t, ((0, 0), (0, S_pad - S)), constant_values=-1)   # pad label
    x = x.reshape(N * C, rows_pad // 8, 8, 128)
    t = t.reshape(N, rows_pad // 8, 8, 128)

    if K == 1:
        x_map = lambda i, s: (i, s, 0, 0)
        t_map = lambda i, s: (i, s, 0, 0)
    else:
        x_map = lambda i, s: (i // K, (i % K) * n_tiles + s, 0, 0)
        t_map = lambda i, s: (i // K, (i % K) * n_tiles + s, 0, 0)

    out_rows = 2 * C + 1
    kernel = functools.partial(_dice_ce_kernel, n_classes=C)

    parts = pl.pallas_call(
        kernel,
        out_shape=jax.ShapeDtypeStruct((N * K, out_rows, 8, 128), jnp.float32),
        grid_spec=pltpu.PrefetchScalarGridSpec(
            num_scalar_prefetch=0,
            grid=(N * K, n_tiles),
            in_specs=[
                pl.BlockSpec((C, tg, 8, 128), x_map),
                pl.BlockSpec((None, tg, 8, 128), t_map),
            ],
            out_specs=pl.BlockSpec((None, out_rows, 8, 128),
                                   lambda i, s: (i, 0, 0, 0)),
        ),
        compiler_params=pltpu.CompilerParams(
            dimension_semantics=("parallel", "arbitrary"),
            vmem_limit_bytes=vmem_limit),
    )(x, t)

    # Tiny epilogue in plain JAX: cross-lane reduce of the (8,128) partials,
    # combine spatial splits, analytic padded-pixel correction, dice formula.
    sums = jnp.sum(parts, axis=(2, 3)).reshape(N, K, out_rows).sum(axis=1)  # (N, 2C+1)
    inter = sums[:, :C]                                   # (N, C) sum p*y
    denom = sums[:, C:2 * C]                              # (N, C) sum p + sum y
    ce_sum = jnp.sum(sums[:, 2 * C])                      # scalar sum of -log p_t

    n_pad = S_pad - S
    if n_pad:
        # Padded pixels: zero logits, label -1 -> ce = log(C), p = 1/C, y = 0.
        ce_sum = ce_sum - jnp.float32(N * n_pad) * jnp.log(jnp.float32(C))
        denom = denom - jnp.float32(n_pad) / jnp.float32(C)

    dice = (2.0 * inter + jnp.float32(smooth)) / (denom + jnp.float32(smooth))
    loss_ce = ce_sum / jnp.float32(N * S)
    loss_dice = 1.0 - jnp.mean(dice)
    return ce_weight * loss_ce + dice_weight * loss_dice


def _reference(outputs, targets, *, dice_weight=1.0, ce_weight=1.0, smooth=1e-5):
    N, C = outputs.shape[0], outputs.shape[1]
    logits = outputs.reshape(N, C, -1).astype(jnp.float32)
    t = targets.reshape(N, -1).astype(jnp.int32)
    logp = jax.nn.log_softmax(logits, axis=1)
    ce = -jnp.mean(jnp.take_along_axis(logp, t[:, None, :], axis=1))
    p = jax.nn.softmax(logits, axis=1)
    y = jax.nn.one_hot(t, C, axis=1, dtype=jnp.float32)
    inter = jnp.sum(p * y, axis=2)
    dice = (2.0 * inter + smooth) / (jnp.sum(p, axis=2) + jnp.sum(y, axis=2) + smooth)
    loss_dice = 1.0 - jnp.mean(dice)
    return ce_weight * ce + dice_weight * loss_dice


if __name__ == "__main__":
    key = jax.random.PRNGKey(0)
    k1, k2, k3, k4, k5, k6 = jax.random.split(key, 6)

    # Test 1: aligned-ish 2D case, batch-parallel grid, single tile per sample.
    N, C, H, W = 2, 4, 16, 16
    outputs = jax.random.normal(k1, (N, C, H, W), dtype=jnp.float32)
    targets = jax.random.randint(k2, (N, H, W), 0, C, dtype=jnp.int32)
    loss = jax.block_until_ready(
        dice_and_ce_loss(outputs, targets, dice_weight=1.0, ce_weight=1.0))
    ref = _reference(outputs, targets, dice_weight=1.0, ce_weight=1.0)
    assert jnp.allclose(loss, ref, atol=2e-5, rtol=2e-5), (loss, ref)

    # Test 2: forced tiny tile + forced 2-way spatial split -> multi-tile
    # accumulation, split combine, and analytic padded-pixel correction.
    H2, W2 = 48, 48
    outputs2 = jax.random.normal(k3, (N, C, H2, W2), dtype=jnp.float32)
    targets2 = jax.random.randint(k4, (N, H2, W2), 0, C, dtype=jnp.int32)
    loss2 = jax.block_until_ready(
        dice_and_ce_loss(outputs2, targets2, dice_weight=0.7, ce_weight=1.3,
                         tile_s=1024, n_spatial_splits=2))
    ref2 = _reference(outputs2, targets2, dice_weight=0.7, ce_weight=1.3)
    assert jnp.allclose(loss2, ref2, atol=2e-5, rtol=2e-5), (loss2, ref2)

    # Test 3: N=1 (auto 2-way spatial split for v7x megacore), odd C, bf16 logits.
    outputs3 = jax.random.normal(k5, (1, 3, 13, 11), dtype=jnp.bfloat16)
    targets3 = jax.random.randint(k6, (1, 13, 11), 0, 3, dtype=jnp.int32)
    loss3 = jax.block_until_ready(dice_and_ce_loss(outputs3, targets3))
    ref3 = _reference(outputs3, targets3, dice_weight=1.0, ce_weight=1.0)
    assert jnp.allclose(loss3, ref3, atol=1e-4, rtol=1e-4), (loss3, ref3)

    print("KERNEL_OK")
</pallas_src>

<mosaic_0001>
module attributes {stable_mosaic.version = 11 : i64} {
  func.func @_dice_ce_kernel(%arg0: i32, %arg1: i32, %arg2: memref<4x1x8x128xf32, #tpu.memory_space<vmem>>, %arg3: memref<1x1x8x128xi32, #tpu.memory_space<vmem>>, %arg4: memref<1x9x8x128xf32, #tpu.memory_space<vmem>>) attributes {dimension_semantics = [#tpu.dimension_semantics<parallel>, #tpu.dimension_semantics<arbitrary>], iteration_bounds = array<i64: 2, 1>, scalar_prefetch = 0 : i64, scratch_operands = 0 : i64, tpu.core_type = #tpu.core_type<tc>, window_params = [{transform_indices = @transform_0, window_bounds = array<i64: 4, 1, 8, 128>}, {transform_indices = @transform_1, window_bounds = array<i64: 1, 1, 8, 128>}, {transform_indices = @transform_2, window_bounds = array<i64: 1, 9, 8, 128>}]} {
    %c0_i32 = arith.constant 0 : i32
    %0 = arith.cmpi eq, %arg1, %c0_i32 : i32
    %1 = arith.extui %0 : i1 to i32
    %c0_i32_0 = arith.constant 0 : i32
    %2 = arith.cmpi ne, %1, %c0_i32_0 : i32
    scf.if %2 {
      %cst_51 = arith.constant 0.000000e+00 : f32
      %111 = vector.broadcast %cst_51 : f32 to vector<9x8x128xf32>
      %c0_52 = arith.constant 0 : index
      %c0_53 = arith.constant 0 : index
      %c0_54 = arith.constant 0 : index
      %c0_55 = arith.constant 0 : index
      %112 = vector.load %arg4[%c0_52, %c0_53, %c0_54, %c0_55] : memref<1x9x8x128xf32, #tpu.memory_space<vmem>>, vector<1x9x8x128xf32>
      %113 = vector.shape_cast %112 : vector<1x9x8x128xf32> to vector<9x8x128xf32>
      %114 = vector.shape_cast %111 : vector<9x8x128xf32> to vector<1x9x8x128xf32>
      tpu.vector_store %arg4[%c0_52, %c0_53, %c0_54, %c0_55], %114 {strides = array<i32>} : memref<1x9x8x128xf32, #tpu.memory_space<vmem>>, vector<1x9x8x128xf32>,
    } else {
    }
    %c0 = arith.constant 0 : index
    %c0_1 = arith.constant 0 : index
    %c0_2 = arith.constant 0 : index
    %c0_3 = arith.constant 0 : index
    %3 = vector.load %arg2[%c0, %c0_1, %c0_2, %c0_3] : memref<4x1x8x128xf32, #tpu.memory_space<vmem>>, vector<4x1x8x128xf32>
    %c0_4 = arith.constant 0 : index
    %c0_5 = arith.constant 0 : index
    %c0_6 = arith.constant 0 : index
    %c0_7 = arith.constant 0 : index
    %4 = vector.load %arg3[%c0_4, %c0_5, %c0_6, %c0_7] : memref<1x1x8x128xi32, #tpu.memory_space<vmem>>, vector<1x1x8x128xi32>
    %5 = vector.shape_cast %4 : vector<1x1x8x128xi32> to vector<1x8x128xi32>
    %cst = arith.constant dense<0xFF800000> : vector<1x8x128xf32>
    %6 = vector.multi_reduction <maximumf>, %3, %cst [0] : vector<4x1x8x128xf32> to vector<1x8x128xf32>
    %7 = vector.shape_cast %6 : vector<1x8x128xf32> to vector<1x1x8x128xf32>
    %8 = vector.broadcast %7 : vector<1x1x8x128xf32> to vector<4x1x8x128xf32>
    %9 = arith.subf %3, %8 : vector<4x1x8x128xf32>
    %10 = math.exp %9 : vector<4x1x8x128xf32>
    %cst_8 = arith.constant dense<0.000000e+00> : vector<1x8x128xf32>
    %11 = vector.multi_reduction <add>, %10, %cst_8 [0] : vector<4x1x8x128xf32> to vector<1x8x128xf32>
    %12 = tpu.reciprocal %11 : vector<1x8x128xf32> -> vector<1x8x128xf32>
    %13 = vector.shape_cast %12 : vector<1x8x128xf32> to vector<1x1x8x128xf32>
    %14 = vector.broadcast %13 : vector<1x1x8x128xf32> to vector<4x1x8x128xf32>
    %15 = arith.mulf %10, %14 : vector<4x1x8x128xf32>
    %16 = math.log %11 : vector<1x8x128xf32>
    %17 = arith.addf %16, %6 : vector<1x8x128xf32>
    %cst_9 = arith.constant dense<0.000000e+00> : vector<4x8x128xf32>
    %18 = vector.multi_reduction <add>, %15, %cst_9 [1] : vector<4x1x8x128xf32> to vector<4x8x128xf32>
    %cst_10 = arith.constant 0.000000e+00 : f32
    %19 = vector.broadcast %cst_10 : f32 to vector<1x8x128xf32>
    %c0_i32_11 = arith.constant 0 : i32
    %20 = vector.broadcast %c0_i32_11 : i32 to vector<1x8x128xi32>
    %21 = arith.cmpi eq, %5, %20 : vector<1x8x128xi32>
    %22 = vector.extract_strided_slice %3 {offsets = [0, 0, 0, 0], sizes = [1, 1, 8, 128], strides = [1, 1, 1, 1]} : vector<4x1x8x128xf32> to vector<1x1x8x128xf32>
    %23 = vector.shape_cast %22 : vector<1x1x8x128xf32> to vector<1x8x128xf32>
    %cst_12 = arith.constant 0.000000e+00 : f32
    %24 = vector.broadcast %cst_12 : f32 to vector<1x8x128xf32>
    %25 = arith.select %21, %23, %24 : vector<1x8x128xi1>, vector<1x8x128xf32>
    %26 = arith.addf %19, %25 : vector<1x8x128xf32>
    %27 = vector.extract_strided_slice %15 {offsets = [0, 0, 0, 0], sizes = [1, 1, 8, 128], strides = [1, 1, 1, 1]} : vector<4x1x8x128xf32> to vector<1x1x8x128xf32>
    %28 = vector.shape_cast %27 : vector<1x1x8x128xf32> to vector<1x8x128xf32>
    %cst_13 = arith.constant 0.000000e+00 : f32
    %29 = vector.broadcast %cst_13 : f32 to vector<1x8x128xf32>
    %30 = arith.select %21, %28, %29 : vector<1x8x128xi1>, vector<1x8x128xf32>
    %cst_14 = arith.constant dense<0.000000e+00> : vector<8x128xf32>
    %31 = vector.multi_reduction <add>, %30, %cst_14 [0] : vector<1x8x128xf32> to vector<8x128xf32>
    %32 = arith.extui %21 : vector<1x8x128xi1> to vector<1x8x128xi32>
    %33 = arith.sitofp %32 : vector<1x8x128xi32> to vector<1x8x128xf32>
    %cst_15 = arith.constant dense<0.000000e+00> : vector<8x128xf32>
    %34 = vector.multi_reduction <add>, %33, %cst_15 [0] : vector<1x8x128xf32> to vector<8x128xf32>
    %c1_i32 = arith.constant 1 : i32
    %35 = vector.broadcast %c1_i32 : i32 to vector<1x8x128xi32>
    %36 = arith.cmpi eq, %5, %35 : vector<1x8x128xi32>
    %37 = vector.extract_strided_slice %3 {offsets = [1, 0, 0, 0], sizes = [1, 1, 8, 128], strides = [1, 1, 1, 1]} : vector<4x1x8x128xf32> to vector<1x1x8x128xf32>
    %38 = vector.shape_cast %37 : vector<1x1x8x128xf32> to vector<1x8x128xf32>
    %cst_16 = arith.constant 0.000000e+00 : f32
    %39 = vector.broadcast %cst_16 : f32 to vector<1x8x128xf32>
    %40 = arith.select %36, %38, %39 : vector<1x8x128xi1>, vector<1x8x128xf32>
    %41 = arith.addf %26, %40 : vector<1x8x128xf32>
    %42 = vector.extract_strided_slice %15 {offsets = [1, 0, 0, 0], sizes = [1, 1, 8, 128], strides = [1, 1, 1, 1]} : vector<4x1x8x128xf32> to vector<1x1x8x128xf32>
    %43 = vector.shape_cast %42 : vector<1x1x8x128xf32> to vector<1x8x128xf32>
    %cst_17 = arith.constant 0.000000e+00 : f32
    %44 = vector.broadcast %cst_17 : f32 to vector<1x8x128xf32>
    %45 = arith.select %36, %43, %44 : vector<1x8x128xi1>, vector<1x8x128xf32>
    %cst_18 = arith.constant dense<0.000000e+00> : vector<8x128xf32>
    %46 = vector.multi_reduction <add>, %45, %cst_18 [0] : vector<1x8x128xf32> to vector<8x128xf32>
    %47 = arith.extui %36 : vector<1x8x128xi1> to vector<1x8x128xi32>
    %48 = arith.sitofp %47 : vector<1x8x128xi32> to vector<1x8x128xf32>
    %cst_19 = arith.constant dense<0.000000e+00> : vector<8x128xf32>
    %49 = vector.multi_reduction <add>, %48, %cst_19 [0] : vector<1x8x128xf32> to vector<8x128xf32>
    %c2_i32 = arith.constant 2 : i32
    %50 = vector.broadcast %c2_i32 : i32 to vector<1x8x128xi32>
    %51 = arith.cmpi eq, %5, %50 : vector<1x8x128xi32>
    %52 = vector.extract_strided_slice %3 {offsets = [2, 0, 0, 0], sizes = [1, 1, 8, 128], strides = [1, 1, 1, 1]} : vector<4x1x8x128xf32> to vector<1x1x8x128xf32>
    %53 = vector.shape_cast %52 : vector<1x1x8x128xf32> to vector<1x8x128xf32>
    %cst_20 = arith.constant 0.000000e+00 : f32
    %54 = vector.broadcast %cst_20 : f32 to vector<1x8x128xf32>
    %55 = arith.select %51, %53, %54 : vector<1x8x128xi1>, vector<1x8x128xf32>
    %56 = arith.addf %41, %55 : vector<1x8x128xf32>
    %57 = vector.extract_strided_slice %15 {offsets = [2, 0, 0, 0], sizes = [1, 1, 8, 128], strides = [1, 1, 1, 1]} : vector<4x1x8x128xf32> to vector<1x1x8x128xf32>
    %58 = vector.shape_cast %57 : vector<1x1x8x128xf32> to vector<1x8x128xf32>
    %cst_21 = arith.constant 0.000000e+00 : f32
    %59 = vector.broadcast %cst_21 : f32 to vector<1x8x128xf32>
    %60 = arith.select %51, %58, %59 : vector<1x8x128xi1>, vector<1x8x128xf32>
    %cst_22 = arith.constant dense<0.000000e+00> : vector<8x128xf32>
    %61 = vector.multi_reduction <add>, %60, %cst_22 [0] : vector<1x8x128xf32> to vector<8x128xf32>
    %62 = arith.extui %51 : vector<1x8x128xi1> to vector<1x8x128xi32>
    %63 = arith.sitofp %62 : vector<1x8x128xi32> to vector<1x8x128xf32>
    %cst_23 = arith.constant dense<0.000000e+00> : vector<8x128xf32>
    %64 = vector.multi_reduction <add>, %63, %cst_23 [0] : vector<1x8x128xf32> to vector<8x128xf32>
    %c3_i32 = arith.constant 3 : i32
    %65 = vector.broadcast %c3_i32 : i32 to vector<1x8x128xi32>
    %66 = arith.cmpi eq, %5, %65 : vector<1x8x128xi32>
    %67 = vector.extract_strided_slice %3 {offsets = [3, 0, 0, 0], sizes = [1, 1, 8, 128], strides = [1, 1, 1, 1]} : vector<4x1x8x128xf32> to vector<1x1x8x128xf32>
    %68 = vector.shape_cast %67 : vector<1x1x8x128xf32> to vector<1x8x128xf32>
    %cst_24 = arith.constant 0.000000e+00 : f32
    %69 = vector.broadcast %cst_24 : f32 to vector<1x8x128xf32>
    %70 = arith.select %66, %68, %69 : vector<1x8x128xi1>, vector<1x8x128xf32>
    %71 = arith.addf %56, %70 : vector<1x8x128xf32>
    %72 = vector.extract_strided_slice %15 {offsets = [3, 0, 0, 0], sizes = [1, 1, 8, 128], strides = [1, 1, 1, 1]} : vector<4x1x8x128xf32> to vector<1x1x8x128xf32>
    %73 = vector.shape_cast %72 : vector<1x1x8x128xf32> to vector<1x8x128xf32>
    %cst_25 = arith.constant 0.000000e+00 : f32
    %74 = vector.broadcast %cst_25 : f32 to vector<1x8x128xf32>
    %75 = arith.select %66, %73, %74 : vector<1x8x128xi1>, vector<1x8x128xf32>
    %cst_26 = arith.constant dense<0.000000e+00> : vector<8x128xf32>
    %76 = vector.multi_reduction <add>, %75, %cst_26 [0] : vector<1x8x128xf32> to vector<8x128xf32>
    %77 = arith.extui %66 : vector<1x8x128xi1> to vector<1x8x128xi32>
    %78 = arith.sitofp %77 : vector<1x8x128xi32> to vector<1x8x128xf32>
    %cst_27 = arith.constant dense<0.000000e+00> : vector<8x128xf32>
    %79 = vector.multi_reduction <add>, %78, %cst_27 [0] : vector<1x8x128xf32> to vector<8x128xf32>
    %80 = vector.shape_cast %31 : vector<8x128xf32> to vector<1x8x128xf32>
    %81 = vector.shape_cast %46 : vector<8x128xf32> to vector<1x8x128xf32>
    %82 = vector.shape_cast %61 : vector<8x128xf32> to vector<1x8x128xf32>
    %83 = vector.shape_cast %76 : vector<8x128xf32> to vector<1x8x128xf32>
    %84 = tpu.concatenate %80, %81, %82, %83 in 0 : vector<1x8x128xf32>, vector<1x8x128xf32>, vector<1x8x128xf32>, vector<1x8x128xf32> -> vector<4x8x128xf32>
    %85 = vector.shape_cast %34 : vector<8x128xf32> to vector<1x8x128xf32>
    %86 = vector.shape_cast %49 : vector<8x128xf32> to vector<1x8x128xf32>
    %87 = vector.shape_cast %64 : vector<8x128xf32> to vector<1x8x128xf32>
    %88 = vector.shape_cast %79 : vector<8x128xf32> to vector<1x8x128xf32>
    %89 = tpu.concatenate %85, %86, %87, %88 in 0 : vector<1x8x128xf32>, vector<1x8x128xf32>, vector<1x8x128xf32>, vector<1x8x128xf32> -> vector<4x8x128xf32>
    %90 = arith.addf %18, %89 : vector<4x8x128xf32>
    %91 = arith.subf %17, %71 : vector<1x8x128xf32>
    %cst_28 = arith.constant dense<0.000000e+00> : vector<8x128xf32>
    %92 = vector.multi_reduction <add>, %91, %cst_28 [0] : vector<1x8x128xf32> to vector<8x128xf32>
    %c0_29 = arith.constant 0 : index
    %c0_30 = arith.constant 0 : index
    %c0_31 = arith.constant 0 : index
    %c0_32 = arith.constant 0 : index
    %93 = vector.load %arg4[%c0_29, %c0_30, %c0_31, %c0_32] : memref<1x9x8x128xf32, #tpu.memory_space<vmem>>, vector<1x4x8x128xf32>
    %94 = vector.shape_cast %93 : vector<1x4x8x128xf32> to vector<4x8x128xf32>
    %95 = arith.addf %94, %84 : vector<4x8x128xf32>
    %c0_33 = arith.constant 0 : index
    %c0_34 = arith.constant 0 : index
    %c0_35 = arith.constant 0 : index
    %c0_36 = arith.constant 0 : index
    %96 = vector.load %arg4[%c0_33, %c0_34, %c0_35, %c0_36] : memref<1x9x8x128xf32, #tpu.memory_space<vmem>>, vector<1x4x8x128xf32>
    %97 = vector.shape_cast %96 : vector<1x4x8x128xf32> to vector<4x8x128xf32>
    %98 = vector.shape_cast %95 : vector<4x8x128xf32> to vector<1x4x8x128xf32>
    tpu.vector_store %arg4[%c0_33, %c0_34, %c0_35, %c0_36], %98 {strides = array<i32>} : memref<1x9x8x128xf32, #tpu.memory_space<vmem>>, vector<1x4x8x128xf32>,
    %c0_37 = arith.constant 0 : index
    %c4 = arith.constant 4 : index
    %c0_38 = arith.constant 0 : index
    %c0_39 = arith.constant 0 : index
    %99 = vector.load %arg4[%c0_37, %c4, %c0_38, %c0_39] : memref<1x9x8x128xf32, #tpu.memory_space<vmem>>, vector<1x4x8x128xf32>
    %100 = vector.shape_cast %99 : vector<1x4x8x128xf32> to vector<4x8x128xf32>
    %101 = arith.addf %100, %90 : vector<4x8x128xf32>
    %c0_40 = arith.constant 0 : index
    %c4_41 = arith.constant 4 : index
    %c0_42 = arith.constant 0 : index
    %c0_43 = arith.constant 0 : index
    %102 = vector.load %arg4[%c0_40, %c4_41, %c0_42, %c0_43] : memref<1x9x8x128xf32, #tpu.memory_space<vmem>>, vector<1x4x8x128xf32>
    %103 = vector.shape_cast %102 : vector<1x4x8x128xf32> to vector<4x8x128xf32>
    %104 = vector.shape_cast %101 : vector<4x8x128xf32> to vector<1x4x8x128xf32>
    tpu.vector_store %arg4[%c0_40, %c4_41, %c0_42, %c0_43], %104 {strides = array<i32>} : memref<1x9x8x128xf32, #tpu.memory_space<vmem>>, vector<1x4x8x128xf32>,
    %c0_44 = arith.constant 0 : index
    %c8 = arith.constant 8 : index
    %c0_45 = arith.constant 0 : index
    %c0_46 = arith.constant 0 : index
    %105 = vector.load %arg4[%c0_44, %c8, %c0_45, %c0_46] : memref<1x9x8x128xf32, #tpu.memory_space<vmem>>, vector<1x1x8x128xf32>
    %106 = vector.shape_cast %105 : vector<1x1x8x128xf32> to vector<8x128xf32>
    %107 = arith.addf %106, %92 : vector<8x128xf32>
    %c0_47 = arith.constant 0 : index
    %c8_48 = arith.constant 8 : index
    %c0_49 = arith.constant 0 : index
    %c0_50 = arith.constant 0 : index
    %108 = vector.load %arg4[%c0_47, %c8_48, %c0_49, %c0_50] : memref<1x9x8x128xf32, #tpu.memory_space<vmem>>, vector<1x1x8x128xf32>
    %109 = vector.shape_cast %108 : vector<1x1x8x128xf32> to vector<8x128xf32>
    %110 = vector.shape_cast %107 : vector<8x128xf32> to vector<1x1x8x128xf32>
    tpu.vector_store %arg4[%c0_47, %c8_48, %c0_49, %c0_50], %110 {strides = array<i32>} : memref<1x9x8x128xf32, #tpu.memory_space<vmem>>, vector<1x1x8x128xf32>,
    return
  }
  func.func @transform_0(%arg0: i32, %arg1: i32) -> (i32, i32, i32, i32) {
    %c0_i32 = arith.constant 0 : i32
    %c0_i32_0 = arith.constant 0 : i32
    %c0_i32_1 = arith.constant 0 : i32
    return %arg0, %arg1, %c0_i32, %c0_i32_0 : i32, i32, i32, i32
  }
  func.func @transform_1(%arg0: i32, %arg1: i32) -> (i32, i32, i32, i32) {
    %c0_i32 = arith.constant 0 : i32
    %c0_i32_0 = arith.constant 0 : i32
    %c0_i32_1 = arith.constant 0 : i32
    return %arg0, %arg1, %c0_i32, %c0_i32_0 : i32, i32, i32, i32
  }
  func.func @transform_2(%arg0: i32, %arg1: i32) -> (i32, i32, i32, i32) {
    %c0_i32 = arith.constant 0 : i32
    %c0_i32_0 = arith.constant 0 : i32
    %c0_i32_1 = arith.constant 0 : i32
    %c0_i32_2 = arith.constant 0 : i32
    return %arg0, %c0_i32, %c0_i32_0, %c0_i32_1 : i32, i32, i32, i32
  }
}

</mosaic_0001>

<llo_original>
// kernel: tpu_custom_call.1
$region0: #{tpu_custom_call.1}
  #allocation0 [shape = 'u32[]', space=smem, size = 0x4, offset = 0x4, fixed_abs, tag = 'smem constant byte address 0x4 - core index']
  #allocation1 [shape = 'u32[144,128]{1,0:T(1,128)}', space=vmem, size = 0x12000, scoped, tag = 'internal scratch']
  %s0 = inlined_call_operand.hbm [shape: f32[8,1,8,128], index: 0, kind: input, shape index: {}]
  %s1 = inlined_call_operand.hbm [shape: s32[2,1,8,128], index: 1, kind: input, shape index: {}]
  %s2 = inlined_call_operand.hbm [shape: f32[2,9,8,128], index: 2, kind: output, shape index: {}]
  %s3 = sld [smem:[#allocation0]]
  $region53: #{tpu_custom_call.1} parent=0
    _
  %s5 = ssub.s32 1, %s3
  %s6 = scalar_select 0, %s5, %s3
  $region1: #{tpu_custom_call.1} parent=0
    #allocation2 [shape = 'u8[32768]{0}', space=vmem, size = 0x8000, scoped, tag = 'input window, operand 0']
    #allocation3 [shape = 's32[2]{0}', space=sflag, size = 0x8, scoped, tag = 'scoped memory for tpu_custom_call.1']
    #allocation4 [shape = 's32[2]{0}', space=sflag, size = 0x8, scoped, tag = 'scoped memory for tpu_custom_call.1']
    #allocation5 [shape = 'u8[8192]{0}', space=vmem, size = 0x2000, scoped, tag = 'input window, operand 1']
    #allocation6 [shape = 's32[2]{0}', space=sflag, size = 0x8, scoped, tag = 'scoped memory for tpu_custom_call.1']
    #allocation7 [shape = 'u8[73728]{0}', space=vmem, size = 0x12000, scoped, tag = 'output window, operand 0']
    %7 = vsyncpa [#allocation3], 0
    %s8 = scalar_lea.sflag [#allocation3], 1
    %9 = vsyncpa %s8, 0
    %10 = vsyncpa [#allocation6], 0
    %s11 = scalar_lea.sflag [#allocation6], 1
    %12 = vsyncpa %s11, 0
    %13 = vsyncpa [#allocation4], 0
    %s14 = scalar_lea.sflag [#allocation4], 1
    %15 = vsyncpa %s14, 0
    loop: start=0, step=1, limit=4
    $region2: #{tpu_custom_call.1} parent=1 // loop_pre_header
      _
    $region3: #{tpu_custom_call.1} parent=1 // loop_header
      %s17 = sphi 0, %s21
      %p18 = scmp.ge.s32.totalorder %s17, 4
      %s24 = sphi 0, %s36
      %s25 = sphi 0, %s32
      %s26 = sphi 0, %s24
      %s27 = sphi 0, %s25
      %s28 = sphi 0, %s26
      %s29 = sphi 0, %s27
      %s41 = sphi 0, %s43
      %s44 = sphi 0, %s41
      %s45 = sphi 0, %s44
      %s61 = sphi 0, %s45
      %s69 = sphi 0, %s71
      %s72 = sphi 0, %s69
      %s73 = sphi 0, %s72
      %s89 = sphi 0, %s73
      %s95 = sphi 0, %s97
      %s98 = sphi 0, %s95
      %s99 = sphi 0, %s98
      %s115 = sphi 0, %s99
    $region4: #{tpu_custom_call.1} parent=1 // loop_header_branch
      %20 = sbr.rel (%p18) target = $region8
    $region5: #{tpu_custom_call.1} parent=1 // loop_body
      %s22 = ssub.s32 %s17, 1
      %s23 = ssub.s32 %s17, 2
      %s30 = sadd.s32 1, %s25
      %p31 = scmp.ge.s32.totalorder %s30, 1
      %s32 = scalar_select %p31, 0, %s30
      %s33 = sadd.s32 1, %s24
      %s34 = scalar_select %p31, %s33, %s24
      %p35 = scmp.ge.s32.totalorder %s34, 2
      %s36 = scalar_select %p35, 0, %s34
      %s37 = ssub.s32 %s24, %s36
      %s38 = ssub.s32 %s25, %s32
      %s39 = sor.u32 %s37, %s38
      %p40 = scmp.eq.s32.totalorder %s39, 0
      %s42 = sadd.s32 %s41, 1
      %s43 = scalar_select %p40, %s41, %s42
      %p46 = pneg %p40
      %p47 = scmp.eq.s32.totalorder %s17, 1
      %p48 = por %p46, %p47
      %p49 = scmp.ne.s32.totalorder %s41, %s44
      %p50 = scmp.eq.s32.totalorder %s17, 0
      %p51 = por %p49, %p50
      %p52 = scmp.ne.s32.totalorder %s41, %s44
      %p53 = scmp.eq.s32.totalorder %s22, 1
      %p54 = por %p52, %p53
      %p55 = scmp.ne.s32.totalorder %s44, %s45
      %p56 = scmp.eq.s32.totalorder %s22, 0
      %p57 = por %p55, %p56
      %p58 = scmp.ne.s32.totalorder %s44, %s45
      %p59 = scmp.eq.s32.totalorder %s23, 1
      %p60 = por %p58, %p59
      %p62 = scmp.ne.s32.totalorder %s45, %s61
      %p63 = scmp.eq.s32.totalorder %s23, 0
      %p64 = por %p62, %p63
      %s65 = ssub.s32 %s24, %s36
      %s66 = ssub.s32 %s25, %s32
      %s67 = sor.u32 %s65, %s66
      %p68 = scmp.eq.s32.totalorder %s67, 0
      %s70 = sadd.s32 %s69, 1
      %s71 = scalar_select %p68, %s69, %s70
      %p74 = pneg %p68
      %p75 = scmp.eq.s32.totalorder %s17, 1
      %p76 = por %p74, %p75
      %p77 = scmp.ne.s32.totalorder %s69, %s72
      %p78 = scmp.eq.s32.totalorder %s17, 0
      %p79 = por %p77, %p78
      %p80 = scmp.ne.s32.totalorder %s69, %s72
      %p81 = scmp.eq.s32.totalorder %s22, 1
      %p82 = por %p80, %p81
      %p83 = scmp.ne.s32.totalorder %s72, %s73
      %p84 = scmp.eq.s32.totalorder %s22, 0
      %p85 = por %p83, %p84
      %p86 = scmp.ne.s32.totalorder %s72, %s73
      %p87 = scmp.eq.s32.totalorder %s23, 1
      %p88 = por %p86, %p87
      %p90 = scmp.ne.s32.totalorder %s73, %s89
      %p91 = scmp.eq.s32.totalorder %s23, 0
      %p92 = por %p90, %p91
      %s93 = ssub.s32 %s24, %s36
      %p94 = scmp.eq.s32.totalorder %s93, 0
      %s96 = sadd.s32 %s95, 1
      %s97 = scalar_select %p94, %s95, %s96
      %p100 = pneg %p94
      %p101 = scmp.eq.s32.totalorder %s17, 1
      %p102 = por %p100, %p101
      %p103 = scmp.ne.s32.totalorder %s95, %s98
      %p104 = scmp.eq.s32.totalorder %s17, 0
      %p105 = por %p103, %p104
      %p106 = scmp.ne.s32.totalorder %s95, %s98
      %p107 = scmp.eq.s32.totalorder %s22, 1
      %p108 = por %p106, %p107
      %p109 = scmp.ne.s32.totalorder %s98, %s99
      %p110 = scmp.eq.s32.totalorder %s22, 0
      %p111 = por %p109, %p110
      %p112 = scmp.ne.s32.totalorder %s98, %s99
      %p113 = scmp.eq.s32.totalorder %s23, 1
      %p114 = por %p112, %p113
      %p116 = scmp.ne.s32.totalorder %s99, %s115
      %p117 = scmp.eq.s32.totalorder %s23, 0
      %p118 = por %p116, %p117
      %p119 = scmp.le.s32.totalorder 1, %s17
      %p120 = scmp.lt.s32.totalorder %s17, 3
      %p121 = pnand %p119, %p120
      %p122 = pneg %p121
      // Predicated region
      $region9: #{tpu_custom_call.1} parent=5 // pred_check
        _
      $region10: #{tpu_custom_call.1} parent=5 // pred_check_branch
        %124 = sbr.rel (%p121) target = $region12
      $region11: #{tpu_custom_call.1} parent=5 // pred_region
        %s125 = ssub.s32 %s17, 1
      $region12: #{tpu_custom_call.1} parent=5 // pred_fallthru
        _
      %p126 = scmp.lt.s32.totalorder %s17, 2
      // Predicated region
      $region13: #{tpu_custom_call.1} parent=5 // pred_check
        %p127 = pneg %p126
      $region14: #{tpu_custom_call.1} parent=5 // pred_check_branch
        %129 = sbr.rel (%p127) target = $region16
      $region15: #{tpu_custom_call.1} parent=5 // pred_region
        // Predicated region
        $region17: #{tpu_custom_call.1} parent=15 // pred_check
          %p130 = pneg %p51
        $region18: #{tpu_custom_call.1} parent=15 // pred_check_branch
          %132 = sbr.rel (%p130) target = $region20
        $region19: #{tpu_custom_call.1} parent=15 // pred_region
          %s133 = sand.u32 %s41, 1
          %s134 = scalar_lea.sflag [#allocation3], %s133
          %s135 = sand.u32 %s41, 1
          %s136 = smul.addr %s135, 32
          %s137 = scalar_lea.vmem [#allocation2], %s136
          %s138 = smul.u32 4, %s24
          %s140 = ssub.s32 512, 512
          %141 = vsyncadd %s134, %s140
          %s142 = sadd.s32 %s25, %s138
          %s143 = smul.addr %s142, 128
          %s144 = scalar_lea.hbm %s0, %s143
          %s145 = sshll.u32 %s137, 4
          %s146 = int_to_ptr.vmem [resolvable:$true] %s145
          %151 = dma.hbm_to_vmem [thread:$0]  %s144, 512, %s146, %s134, 128, 128, 8
        $region20: #{tpu_custom_call.1} parent=15 // pred_fallthru
          _
        // Predicated region
        $region21: #{tpu_custom_call.1} parent=15 // pred_check
          %p152 = pneg %p79
        $region22: #{tpu_custom_call.1} parent=15 // pred_check_branch
          %154 = sbr.rel (%p152) target = $region24
        $region23: #{tpu_custom_call.1} parent=15 // pred_region
          %s155 = sand.u32 %s69, 1
          %s156 = scalar_lea.sflag [#allocation6], %s155
          %s157 = sand.u32 %s69, 1
          %s158 = smul.addr %s157, 8
          %s159 = scalar_lea.vmem [#allocation5], %s158
          %s161 = ssub.s32 128, 128
          %162 = vsyncadd %s156, %s161
          %s163 = sadd.s32 %s25, %s24
          %s164 = smul.addr %s163, 128
          %s165 = scalar_lea.hbm %s1, %s164
          %s167 = sshll.u32 %s159, 4
          %s168 = int_to_ptr.vmem [resolvable:$true] %s167
          %170 = dma.hbm_to_vmem [thread:$0]  %s165, 128, %s168, %s156
        $region24: #{tpu_custom_call.1} parent=15 // pred_fallthru
          _
      $region16: #{tpu_custom_call.1} parent=5 // pred_fallthru
        _
      %p171 = scmp.le.s32.totalorder 1, %s17
      %p172 = scmp.lt.s32.totalorder %s17, 3
      %p173 = pnand %p171, %p172
      %p174 = pneg %p173
      // Predicated region
      $region25: #{tpu_custom_call.1} parent=5 // pred_check
        _
      $region26: #{tpu_custom_call.1} parent=5 // pred_check_branch
        %176 = sbr.rel (%p173) target = $region28
      $region27: #{tpu_custom_call.1} parent=5 // pred_region
        %s177 = ssub.s32 %s17, 1
        %s178 = sand.u32 %s44, 1
        %s179 = scalar_lea.sflag [#allocation3], %s178
        %s180 = sand.u32 %s44, 1
        %s181 = smul.addr %s180, 32
        %s182 = scalar_lea.vmem [#allocation2], %s181
        // Predicated region
        $region29: #{tpu_custom_call.1} parent=27 // pred_check
          %p183 = pneg %p57
        $region30: #{tpu_custom_call.1} parent=27 // pred_check_branch
          %185 = sbr.rel (%p183) target = $region32
        $region31: #{tpu_custom_call.1} parent=27 // pred_region
          %186 = dma.done %s179, 512
        $region32: #{tpu_custom_call.1} parent=27 // pred_fallthru
          _
        %s187 = sand.u32 %s72, 1
        %s188 = scalar_lea.sflag [#allocation6], %s187
        %s189 = sand.u32 %s72, 1
        %s190 = smul.addr %s189, 8
        %s191 = scalar_lea.vmem [#allocation5], %s190
        // Predicated region
        $region33: #{tpu_custom_call.1} parent=27 // pred_check
          %p192 = pneg %p85
        $region34: #{tpu_custom_call.1} parent=27 // pred_check_branch
          %194 = sbr.rel (%p192) target = $region36
        $region35: #{tpu_custom_call.1} parent=27 // pred_region
          %195 = dma.done %s188, 128
        $region36: #{tpu_custom_call.1} parent=27 // pred_fallthru
          _
        %s196 = sand.u32 %s44, 1
        %s197 = scalar_lea.sflag [#allocation3], %s196
        %s198 = sand.u32 %s44, 1
        %s199 = smul.addr %s198, 32
        %s200 = scalar_lea.vmem [#allocation2], %s199
        %p201 = pneg %p57
        %p202 = pneg %p54
        %s203 = sand.u32 %s72, 1
        %s204 = scalar_lea.sflag [#allocation6], %s203
        %s205 = sand.u32 %s72, 1
        %s206 = smul.addr %s205, 8
        %s207 = scalar_lea.vmem [#allocation5], %s206
        %p208 = pneg %p85
        %p209 = pneg %p82
        %p210 = pneg %p111
        %p211 = pneg %p108
        %s212 = sand.u32 %s98, 1
        %s213 = scalar_lea.sflag [#allocation4], %s212
        %s214 = sand.u32 %s98, 1
        %s215 = smul.addr %s214, 72
        %s216 = scalar_lea.vmem [#allocation7], %s215
        %s217 = smul.u32 4, %s26
        %p218 = scmp.eq.s32.totalorder %s27, 0
        // Predicated region
        $region37: #{tpu_custom_call.1} parent=27 // pred_check
          %p219 = pneg %p218
        $region38: #{tpu_custom_call.1} parent=27 // pred_check_branch
          %221 = sbr.rel (%p219) target = $region40
        $region39: #{tpu_custom_call.1} parent=27 // pred_region
          %222 = vst [vmem:[%s216] sm:$0xff] 0.0
          %223 = vst [vmem:[%s216 + $0x8] sm:$0xff] 0.0
          %224 = vst [vmem:[%s216 + $0x10] sm:$0xff] 0.0
          %225 = vst [vmem:[%s216 + $0x18] sm:$0xff] 0.0
          %226 = vst [vmem:[%s216 + $0x20] sm:$0xff] 0.0
          %227 = vst [vmem:[%s216 + $0x28] sm:$0xff] 0.0
          %228 = vst [vmem:[%s216 + $0x30] sm:$0xff] 0.0
          %229 = vst [vmem:[%s216 + $0x38] sm:$0xff] 0.0
          %230 = vst [vmem:[%s216 + $0x40] sm:$0xff] 0.0
        $region40: #{tpu_custom_call.1} parent=27 // pred_fallthru
          _
        %v231 = vld [vmem:[%s182] sm:$0xff]
        %v232 = vld [vmem:[%s182 + $0x8] sm:$0xff]
        %v233 = vld [vmem:[%s182 + $0x10] sm:$0xff]
        %v234 = vld [vmem:[%s182 + $0x18] sm:$0xff]
        %v235 = vld [vmem:[%s191] sm:$0xff]
        %v236 = vmax.f32 %v231, %v232
        %v237 = vmax.f32 %v233, %v234
        %v238 = vmax.f32 %v236, %v237
        %v239 = vsub.f32 %v231, %v238
        %v240 = vsub.f32 %v232, %v238
        %v241 = vsub.f32 %v233, %v238
        %v242 = vsub.f32 %v234, %v238
        %v243 = vmul.f32 %v239, 1.442695
        %v244 = vpow.pop %v243
        %v245 = vmul.f32 %v240, 1.442695
        %v246 = vpow.pop %v245
        %v247 = vmul.f32 %v241, 1.442695
        %v248 = vpow.pop %v247
        %v249 = vmul.f32 %v242, 1.442695
        %v250 = vpow.pop %v249
        %v251 = vadd.f32 %v244, %v246
        %v252 = vadd.f32 %v251, %v248
        %v253 = vadd.f32 %v252, %v250
        %v254 = vrcp.pop %v253
        %v255 = vmul.f32 %v244, %v254
        %v256 = vmul.f32 %v246, %v254
        %v257 = vmul.f32 %v248, %v254
        %v258 = vmul.f32 %v250, %v254
        %v259 = vlog2.pop %v253
        %v260 = vmul.f32 %v259, 0.6931472
        %v261 = vadd.f32 %v260, %v238
        %v262 = vadd.f32 %v255, 0.0
        %v263 = vadd.f32 %v256, 0.0
        %v264 = vadd.f32 %v257, 0.0
        %v265 = vadd.f32 %v258, 0.0
        %vm266 = vcmp.eq.s32.totalorder %v235, 0
        %v267 = vsel %vm266, %v231, 0.0
        %v268 = vadd.f32 %v267, 0.0
        %v269 = vsel %vm266, %v255, 0.0
        %v270 = vadd.f32 %v269, 0.0
        %v271 = vsel %vm266, 1, 0
        %v272 = vcvt.s32.f32 %v271
        %v273 = vadd.f32 %v272, 0.0
        %vm274 = vcmp.eq.s32.totalorder %v235, 1
        %v275 = vsel %vm274, %v232, 0.0
        %v276 = vadd.f32 %v268, %v275
        %v277 = vsel %vm274, %v256, 0.0
        %v278 = vadd.f32 %v277, 0.0
        %v279 = vsel %vm274, 1, 0
        %v280 = vcvt.s32.f32 %v279
        %v281 = vadd.f32 %v280, 0.0
        %vm282 = vcmp.eq.s32.totalorder %v235, 2
        %v283 = vsel %vm282, %v233, 0.0
        %v284 = vadd.f32 %v276, %v283
        %v285 = vsel %vm282, %v257, 0.0
        %v286 = vadd.f32 %v285, 0.0
        %v287 = vsel %vm282, 1, 0
        %v288 = vcvt.s32.f32 %v287
        %v289 = vadd.f32 %v288, 0.0
        %vm290 = vcmp.eq.s32.totalorder %v235, 3
        %v291 = vsel %vm290, %v234, 0.0
        %v292 = vadd.f32 %v284, %v291
        %v293 = vsel %vm290, %v258, 0.0
        %v294 = vadd.f32 %v293, 0.0
        %v295 = vsel %vm290, 1, 0
        %v296 = vcvt.s32.f32 %v295
        %v297 = vadd.f32 %v296, 0.0
        %v298 = vadd.f32 %v262, %v273
        %v299 = vadd.f32 %v263, %v281
        %v300 = vadd.f32 %v264, %v289
        %v301 = vadd.f32 %v265, %v297
        %v302 = vsub.f32 %v261, %v292
        %v303 = vadd.f32 %v302, 0.0
        %v304 = vld [vmem:[%s216] sm:$0xff]
        %v305 = vld [vmem:[%s216 + $0x8] sm:$0xff]
        %v306 = vld [vmem:[%s216 + $0x10] sm:$0xff]
        %v307 = vld [vmem:[%s216 + $0x18] sm:$0xff]
        %v308 = vadd.f32 %v304, %v270
        %v309 = vadd.f32 %v305, %v278
        %v310 = vadd.f32 %v306, %v286
        %v311 = vadd.f32 %v307, %v294
        %312 = vst [vmem:[%s216] sm:$0xff] %v308
        %313 = vst [vmem:[%s216 + $0x8] sm:$0xff] %v309
        %314 = vst [vmem:[%s216 + $0x10] sm:$0xff] %v310
        %315 = vst [vmem:[%s216 + $0x18] sm:$0xff] %v311
        %s316 = scalar_lea.vmem %s216, 32 [#allocation7]
        %v317 = vld [vmem:[%s316] sm:$0xff]
        %v318 = vld [vmem:[%s316 + $0x8] sm:$0xff]
        %v319 = vld [vmem:[%s316 + $0x10] sm:$0xff]
        %v320 = vld [vmem:[%s316 + $0x18] sm:$0xff]
        %v321 = vadd.f32 %v317, %v298
        %v322 = vadd.f32 %v318, %v299
        %v323 = vadd.f32 %v319, %v300
        %v324 = vadd.f32 %v320, %v301
        %325 = vst [vmem:[%s316] sm:$0xff] %v321
        %326 = vst [vmem:[%s316 + $0x8] sm:$0xff] %v322
        %327 = vst [vmem:[%s316 + $0x10] sm:$0xff] %v323
        %328 = vst [vmem:[%s316 + $0x18] sm:$0xff] %v324
        %s329 = scalar_lea.vmem %s216, 64 [#allocation7]
        %v330 = vld [vmem:[%s329] sm:$0xff]
        %v331 = vadd.f32 %v330, %v303
        %332 = vst [vmem:[%s329] sm:$0xff] %v331
        %s333 = sand.u32 %s98, 1
        %s334 = scalar_lea.sflag [#allocation4], %s333
        %s335 = sand.u32 %s98, 1
        %s336 = smul.addr %s335, 72
        %s337 = scalar_lea.vmem [#allocation7], %s336
        // Predicated region
        $region41: #{tpu_custom_call.1} parent=27 // pred_check
          %p338 = pneg %p108
        $region42: #{tpu_custom_call.1} parent=27 // pred_check_branch
          %340 = sbr.rel (%p338) target = $region44
        $region43: #{tpu_custom_call.1} parent=27 // pred_region
          %s342 = ssub.s32 1152, 1152
          %343 = vsyncadd %s334, %s342
          %s344 = smul.addr %s26, 9
          %s345 = smul.addr %s344, 128
          %s346 = scalar_lea.hbm %s2, %s345
          %s347 = sshll.u32 %s337, 4
          %s348 = int_to_ptr.vmem [resolvable:$true] %s347
          %353 = dma.vmem_to_hbm [thread:$0]  %s348, 1152, %s346, %s334, 128, 128, 8
        $region44: #{tpu_custom_call.1} parent=27 // pred_fallthru
          _
      $region28: #{tpu_custom_call.1} parent=5 // pred_fallthru
        _
      %p354 = scmp.le.s32.totalorder 2, %s17
      // Predicated region
      $region45: #{tpu_custom_call.1} parent=5 // pred_check
        %p355 = pneg %p354
      $region46: #{tpu_custom_call.1} parent=5 // pred_check_branch
        %357 = sbr.rel (%p355) target = $region48
      $region47: #{tpu_custom_call.1} parent=5 // pred_region
        %s358 = ssub.s32 %s17, 2
        // Predicated region
        $region49: #{tpu_custom_call.1} parent=47 // pred_check
          %p359 = pneg %p114
        $region50: #{tpu_custom_call.1} parent=47 // pred_check_branch
          %361 = sbr.rel (%p359) target = $region52
        $region51: #{tpu_custom_call.1} parent=47 // pred_region
          %s362 = sand.u32 %s99, 1
          %s363 = scalar_lea.sflag [#allocation4], %s362
          %s364 = sand.u32 %s99, 1
          %s365 = smul.addr %s364, 72
          %s366 = scalar_lea.vmem [#allocation7], %s365
          %367 = dma.done %s363, 1152
        $region52: #{tpu_custom_call.1} parent=47 // pred_fallthru
          _
      $region48: #{tpu_custom_call.1} parent=5 // pred_fallthru
        _
    $region6: #{tpu_custom_call.1} parent=1 // loop_footer
      %s21 = sadd.s32 1, %s17
    $region7: #{tpu_custom_call.1} parent=1 // loop_footer_branch
      %16 = sbr.rel target = $region3
    $region8: #{tpu_custom_call.1} parent=1 // loop_exit
      _
    %368 = vsyncpa [#allocation3], 1
    %s369 = scalar_lea.sflag [#allocation3], 1
    %370 = vsyncpa %s369, 1
    %371 = vsyncpa [#allocation6], 1
    %s372 = scalar_lea.sflag [#allocation6], 1
    %373 = vsyncpa %s372, 1
    %374 = vsyncpa [#allocation4], 1
    %s375 = scalar_lea.sflag [#allocation4], 1
    %376 = vsyncpa %s375, 1

</llo_original>
